<compile_context>
chip_gen: v6e
topology: v6e:2x2x1
jax: 0.10.0
libtpu: 0.0.40
codegen_flags: <defaults>
</compile_context>

<pallas_src>
import functools

import jax
import jax.numpy as jnp
import numpy as np
from jax.experimental import pallas as pl
from jax.experimental.pallas import tpu as pltpu


def qmix_kernel(st_ref, aq_ref, wf_ref, out_ref, *, num_agents, hidden_dim, action_dim):
    N, H, A = num_agents, hidden_dim, action_dim
    NH = N * H
    o_b1 = NH                 # start of hyper_b1 segment
    o_w2 = NH + H             # start of hyper_w2 segment (a-major layout: row a*H + h)
    o_b2 = NH + H + H * A     # start of hyper_b2 segment

    # One fused hypernet projection (all 4 Linear layers + biases) on the MXU.
    # bf16 operands / f32 accumulate (f32 MXU inputs are multi-pass on every generation).
    st_bf = st_ref[...].astype(jnp.bfloat16)                                  # (S+1, TB)
    hyp = jnp.dot(wf_ref[...], st_bf, preferred_element_type=jnp.float32)     # (D_pad, TB)

    w1f = jnp.abs(hyp[0:NH])               # (N*H, TB), row a*H + h  (contraction-major)
    b1 = hyp[o_b1:o_b1 + H]                # (H,   TB)
    w2a = jnp.abs(hyp[o_w2:o_w2 + H * A])  # (A*H, TB), row a*H + h  (pre-permuted)
    b2 = hyp[o_b2:o_b2 + A]                # (A,   TB)
    aq = aq_ref[...]                       # (N*A, TB), row n*A + a

    # TODO(synk): if a bundle dump shows the K=S+1=17 MXU matmul still dominating after
    # the bf16 cast, replace it with a 17-term VPU broadcast-FMA over resident wf
    # columns; likewise move the (1,TB)->(H,TB) agent-q sublane broadcasts to stride-0
    # vld (aq_ref[pl.ds(r, H, stride=0), :]) once the XLU becomes the binding slot.
    rows = []
    for n in range(N):
        # hidden[n, h] = relu( sum_a aq[n, a] * w1[a, h] + b1[h] )   per batch lane
        h_acc = b1
        for a in range(A):
            h_acc = h_acc + w1f[a * H:(a + 1) * H] * aq[n * A + a:n * A + a + 1]
        hidden_n = jnp.maximum(h_acc, 0.0)                                    # (H, TB)
        # q[n, a] = sum_h hidden[n, h] * w2[h, a] + b2[a]
        for a in range(A):
            rows.append(jnp.sum(w2a[a * H:(a + 1) * H] * hidden_n, axis=0, keepdims=True)
                        + b2[a:a + 1])                                        # (1, TB)
    # Single unmasked, lane-dense, full-block store.
    out_ref[...] = jnp.concatenate(rows, axis=0).astype(out_ref.dtype)


def pack_qmix_params(params, *, num_agents, hidden_dim, action_dim):
    """Fuse the 4 hypernet layers into one (D_pad, S+1) bf16 weight with biases folded in."""
    (w1t, bw1, wb1t, bb1, w2t, bw2, wb2t, bb2) = params
    S = w1t.shape[0]
    N, H, A = num_agents, hidden_dim, action_dim
    assert H % 8 == 0, "hidden_dim must be a multiple of 8 for sublane-aligned hyp slices"
    # Permute hyper_w2 output columns from (h*A + a) to (a*H + h) so the kernel's
    # second-mixing slices are H-wide and sublane-aligned.
    w2t_p = w2t.reshape(S, H, A).transpose(0, 2, 1).reshape(S, A * H)
    bw2_p = bw2.reshape(1, H, A).transpose(0, 2, 1).reshape(1, A * H)
    wf = jnp.concatenate([w1t, wb1t, w2t_p, wb2t], axis=1)   # (S, D)
    bf = jnp.concatenate([bw1, bb1, bw2_p, bb2], axis=1)     # (1, D)
    wf_aug = jnp.concatenate([wf, bf], axis=0)               # (S+1, D)  bias as last "input"
    D = wf.shape[1]
    D_pad = 8 * pl.cdiv(D, 8)
    wf_t = jnp.pad(wf_aug.T, ((0, D_pad - D), (0, 0)))       # (D_pad, S+1)
    # bf16 MXU operands (f32 accumulate happens in-kernel); cuts MXU passes ~3x.
    return wf_t.astype(jnp.bfloat16)


def _qmix_forward_impl(agent_qs, state, fused_w, *, num_agents, hidden_dim,
                       action_dim, tb_max):
    """agent_qs: (B, N*A) or (B, N, A); state: (B, S); fused_w: pack_qmix_params output."""
    B, S = state.shape
    N, H, A = num_agents, hidden_dim, action_dim
    # torch.bmm(agent_qs (B,N,A), w1 (B,N,H)) only typechecks when A == N — fail loudly.
    assert A == N, "QMIX mixer bmm requires action_dim == num_agents"
    assert H % 8 == 0, "hidden_dim must be a multiple of 8"
    assert tb_max % 128 == 0
    aq = agent_qs.reshape(B, N * A)

    D_pad, S1 = fused_w.shape
    assert S1 == S + 1

    # Batch tiled on the lane axis (TB multiple of 128).  Whenever the batch spans more
    # than one 128-lane group, pick TB so the grid has >= 2 steps: the "parallel" grid
    # axis then shards across v7x's two TensorCores (megacore).
    n128 = pl.cdiv(B, 128)
    if n128 <= 1:
        TB = 128
    else:
        TB = min(tb_max, 128 * pl.cdiv(n128, 2))
    B_pad = TB * pl.cdiv(B, TB)

    # Bias folded in via an appended ones-row (zero for padded lanes -> padded outputs
    # are exactly zero and are sliced off below).
    st_t = jnp.concatenate([state.T, jnp.ones((1, B), state.dtype)], axis=0)  # (S+1, B)
    st_t = jnp.pad(st_t, ((0, 0), (0, B_pad - B)))                            # (S+1, B_pad)
    aq_t = jnp.pad(aq.T, ((0, 0), (0, B_pad - B)))                            # (N*A, B_pad)

    kernel = functools.partial(qmix_kernel, num_agents=N, hidden_dim=H, action_dim=A)

    out_t = pl.pallas_call(
        kernel,
        out_shape=jax.ShapeDtypeStruct((N * A, B_pad), jnp.float32),
        grid=(B_pad // TB,),
        in_specs=[
            pl.BlockSpec((S + 1, TB), lambda i: (0, i)),        # state^T (+ ones row), f32
            pl.BlockSpec((N * A, TB), lambda i: (0, i)),        # agent_qs^T, f32
            pl.BlockSpec((D_pad, S + 1), lambda i: (0, 0)),     # fused hypernet weight, bf16, resident
        ],
        out_specs=pl.BlockSpec((N * A, TB), lambda i: (0, i)),  # q_tot^T (lane-dense stores)
        # VMEM use at TB=2048 is ~8 MB: no explicit vmem_limit_bytes needed even on v7x.
        compiler_params=pltpu.CompilerParams(dimension_semantics=("parallel",)),
    )(st_t, aq_t, fused_w)

    q = out_t[:, :B].T.reshape(B, N, A)
    if N == 1:                       # torch .squeeze(1): only drops dim 1 if it is size 1
        q = jnp.squeeze(q, axis=1)
    return q


_qmix_forward_jit = jax.jit(
    _qmix_forward_impl,
    static_argnames=("num_agents", "hidden_dim", "action_dim", "tb_max"),
)


def qmix_mixer_forward(agent_qs, state, fused_w, *, num_agents, hidden_dim,
                       action_dim, tb_max=2048):
    return _qmix_forward_jit(agent_qs, state, fused_w, num_agents=num_agents,
                             hidden_dim=hidden_dim, action_dim=action_dim, tb_max=tb_max)


def init_params(key, state_dim, num_agents, hidden_dim, action_dim):
    """Deterministic init mimicking nn.Linear (uniform(-1/sqrt(in), 1/sqrt(in))).
    Weights stored pre-transposed as (in, out)."""
    S, N, H, A = state_dim, num_agents, hidden_dim, action_dim
    bound = 1.0 / np.sqrt(S)
    keys = jax.random.split(key, 8)

    def u(k, shape):
        return jax.random.uniform(k, shape, jnp.float32, -bound, bound)

    w1t = u(keys[0], (S, H * N))
    bw1 = u(keys[1], (1, H * N))
    wb1t = u(keys[2], (S, H))
    bb1 = u(keys[3], (1, H))
    w2t = u(keys[4], (S, H * A))
    bw2 = u(keys[5], (1, H * A))
    wb2t = u(keys[6], (S, A))
    bb2 = u(keys[7], (1, A))
    return (w1t, bw1, wb1t, bb1, w2t, bw2, wb2t, bb2)


def qmix_reference(agent_qs, state, params, *, num_agents, hidden_dim, action_dim,
                   bf16_hypernet=False):
    """Pure-JAX reference of the PyTorch forward (original, unfused params).
    bf16_hypernet=True emulates the kernel's numerics: bf16 MXU operands (bias folded
    into the bf16 weight) with f32 accumulation; mixing stays f32."""
    B = state.shape[0]
    N, H, A = num_agents, hidden_dim, action_dim
    (w1t, bw1, wb1t, bb1, w2t, bw2, wb2t, bb2) = params
    hi = jax.lax.Precision.HIGHEST

    def lin(w, b):
        if bf16_hypernet:
            return (jnp.dot(state.astype(jnp.bfloat16), w.astype(jnp.bfloat16),
                            preferred_element_type=jnp.float32)
                    + b.astype(jnp.bfloat16).astype(jnp.float32))
        return jnp.dot(state, w, precision=hi) + b

    aq = agent_qs.reshape(B, N, A)
    w1 = jnp.abs(lin(w1t, bw1)).reshape(B, N, H)
    b1 = lin(wb1t, bb1)
    hidden = jax.nn.relu(jnp.einsum("bna,bah->bnh", aq, w1, precision=hi) + b1[:, None, :])
    w2 = jnp.abs(lin(w2t, bw2)).reshape(B, H, A)
    b2 = lin(wb2t, bb2)
    q = jnp.einsum("bnh,bha->bna", hidden, w2, precision=hi) + b2[:, None, :]
    if N == 1:
        q = jnp.squeeze(q, axis=1)
    return q


if __name__ == "__main__":
    # Note: the PyTorch bmm(agent_qs (B,N,A), w1 (B,N,H)) requires action_dim == num_agents.
    state_dim = 16
    num_agents = 4
    action_dim = 4
    hidden_dim = 32

    key = jax.random.PRNGKey(0)
    k_params, *data_keys = jax.random.split(key, 7)

    params = init_params(k_params, state_dim, num_agents, hidden_dim, action_dim)
    fused_w = pack_qmix_params(params, num_agents=num_agents, hidden_dim=hidden_dim,
                               action_dim=action_dim)

    def run_case(batch, ks, ka):
        state = jax.random.normal(ks, (batch, state_dim), jnp.float32)
        agent_qs = jax.random.normal(ka, (batch, num_agents * action_dim), jnp.float32)
        out = qmix_mixer_forward(agent_qs, state, fused_w, num_agents=num_agents,
                                 hidden_dim=hidden_dim, action_dim=action_dim)
        out = jax.block_until_ready(out)
        # Primary check: reference matching the kernel's numerics (bf16 MXU hypernet
        # operands with f32 accumulate, f32 mixing) — tight tolerance.
        ref_bf16 = qmix_reference(agent_qs, state, params, num_agents=num_agents,
                                  hidden_dim=hidden_dim, action_dim=action_dim,
                                  bf16_hypernet=True)
        np.testing.assert_allclose(np.asarray(out), np.asarray(ref_bf16),
                                   rtol=1e-3, atol=1e-3)
        # Semantic check vs the exact-f32 PyTorch forward: bf16-level hypernet error
        # (accepted per perf review) compounds to O(1e-2) absolute on q_tot ~ O(3),
        # hence the loose tolerance.
        ref_f32 = qmix_reference(agent_qs, state, params, num_agents=num_agents,
                                 hidden_dim=hidden_dim, action_dim=action_dim)
        np.testing.assert_allclose(np.asarray(out), np.asarray(ref_f32),
                                   rtol=5e-2, atol=2e-1)

    # B=2: single grid step (batch padded to 128 lanes).
    run_case(2, data_keys[0], data_keys[1])
    # B=200: TB=128 -> grid of 2 (exercises batch padding + megacore split).
    run_case(200, data_keys[2], data_keys[3])
    # B=1000: TB=512 -> exercises the larger lane tile with 2 grid steps.
    run_case(1000, data_keys[4], data_keys[5])

    print("KERNEL_OK")
</pallas_src>

<mosaic_0001>
module attributes {stable_mosaic.version = 11 : i64} {
  func.func @qmix_kernel(%arg0: i32, %arg1: memref<17x128xf32, #tpu.memory_space<vmem>>, %arg2: memref<16x128xf32, #tpu.memory_space<vmem>>, %arg3: memref<296x17xbf16, #tpu.memory_space<vmem>>, %arg4: memref<16x128xf32, #tpu.memory_space<vmem>>) attributes {dimension_semantics = [#tpu.dimension_semantics<parallel>], iteration_bounds = array<i64: 1>, scalar_prefetch = 0 : i64, scratch_operands = 0 : i64, tpu.core_type = #tpu.core_type<tc>, window_params = [{transform_indices = @transform_0, window_bounds = array<i64: 17, 128>}, {transform_indices = @transform_1, window_bounds = array<i64: 16, 128>}, {pipeline_mode = #tpu.pipeline_mode<synchronous>, transform_indices = @transform_2, window_bounds = array<i64: 296, 17>}, {transform_indices = @transform_3, window_bounds = array<i64: 16, 128>}]} {
    %c0 = arith.constant 0 : index
    %c0_0 = arith.constant 0 : index
    %0 = vector.load %arg1[%c0, %c0_0] : memref<17x128xf32, #tpu.memory_space<vmem>>, vector<17x128xf32>
    %1 = arith.truncf %0 : vector<17x128xf32> to vector<17x128xbf16>
    %c0_1 = arith.constant 0 : index
    %c0_2 = arith.constant 0 : index
    %2 = vector.load %arg3[%c0_1, %c0_2] : memref<296x17xbf16, #tpu.memory_space<vmem>>, vector<296x17xbf16>
    %cst = arith.constant dense<0.000000e+00> : vector<296x128xf32>
    %3 = tpu.matmul %2, %1, %cst {dimension_numbers = #tpu.dot_dimension_numbers<[1], [0], [0], [1], [0, 0, 1, 1], [], []>} : vector<296x17xbf16>, vector<17x128xbf16>, vector<296x128xf32> -> vector<296x128xf32>
    %4 = vector.extract_strided_slice %3 {offsets = [0, 0], sizes = [128, 128], strides = [1, 1]} : vector<296x128xf32> to vector<128x128xf32>
    %5 = math.absf %4 : vector<128x128xf32>
    %6 = vector.extract_strided_slice %3 {offsets = [128, 0], sizes = [32, 128], strides = [1, 1]} : vector<296x128xf32> to vector<32x128xf32>
    %7 = vector.extract_strided_slice %3 {offsets = [160, 0], sizes = [128, 128], strides = [1, 1]} : vector<296x128xf32> to vector<128x128xf32>
    %8 = math.absf %7 : vector<128x128xf32>
    %9 = vector.extract_strided_slice %3 {offsets = [288, 0], sizes = [4, 128], strides = [1, 1]} : vector<296x128xf32> to vector<4x128xf32>
    %c0_3 = arith.constant 0 : index
    %c0_4 = arith.constant 0 : index
    %10 = vector.load %arg2[%c0_3, %c0_4] : memref<16x128xf32, #tpu.memory_space<vmem>>, vector<16x128xf32>
    %11 = vector.extract_strided_slice %5 {offsets = [0, 0], sizes = [32, 128], strides = [1, 1]} : vector<128x128xf32> to vector<32x128xf32>
    %12 = vector.extract_strided_slice %10 {offsets = [0, 0], sizes = [1, 128], strides = [1, 1]} : vector<16x128xf32> to vector<1x128xf32>
    %13 = vector.broadcast %12 : vector<1x128xf32> to vector<32x128xf32>
    %14 = arith.mulf %11, %13 : vector<32x128xf32>
    %15 = arith.addf %6, %14 : vector<32x128xf32>
    %16 = vector.extract_strided_slice %5 {offsets = [32, 0], sizes = [32, 128], strides = [1, 1]} : vector<128x128xf32> to vector<32x128xf32>
    %17 = vector.extract_strided_slice %10 {offsets = [1, 0], sizes = [1, 128], strides = [1, 1]} : vector<16x128xf32> to vector<1x128xf32>
    %18 = vector.broadcast %17 : vector<1x128xf32> to vector<32x128xf32>
    %19 = arith.mulf %16, %18 : vector<32x128xf32>
    %20 = arith.addf %15, %19 : vector<32x128xf32>
    %21 = vector.extract_strided_slice %5 {offsets = [64, 0], sizes = [32, 128], strides = [1, 1]} : vector<128x128xf32> to vector<32x128xf32>
    %22 = vector.extract_strided_slice %10 {offsets = [2, 0], sizes = [1, 128], strides = [1, 1]} : vector<16x128xf32> to vector<1x128xf32>
    %23 = vector.broadcast %22 : vector<1x128xf32> to vector<32x128xf32>
    %24 = arith.mulf %21, %23 : vector<32x128xf32>
    %25 = arith.addf %20, %24 : vector<32x128xf32>
    %26 = vector.extract_strided_slice %5 {offsets = [96, 0], sizes = [32, 128], strides = [1, 1]} : vector<128x128xf32> to vector<32x128xf32>
    %27 = vector.extract_strided_slice %10 {offsets = [3, 0], sizes = [1, 128], strides = [1, 1]} : vector<16x128xf32> to vector<1x128xf32>
    %28 = vector.broadcast %27 : vector<1x128xf32> to vector<32x128xf32>
    %29 = arith.mulf %26, %28 : vector<32x128xf32>
    %30 = arith.addf %25, %29 : vector<32x128xf32>
    %cst_5 = arith.constant 0.000000e+00 : f32
    %31 = vector.broadcast %cst_5 : f32 to vector<32x128xf32>
    %32 = arith.maximumf %30, %31 : vector<32x128xf32>
    %33 = vector.extract_strided_slice %8 {offsets = [0, 0], sizes = [32, 128], strides = [1, 1]} : vector<128x128xf32> to vector<32x128xf32>
    %34 = arith.mulf %33, %32 : vector<32x128xf32>
    %cst_6 = arith.constant dense<0.000000e+00> : vector<128xf32>
    %35 = vector.multi_reduction <add>, %34, %cst_6 [0] : vector<32x128xf32> to vector<128xf32>
    %36 = vector.shape_cast %35 : vector<128xf32> to vector<1x128xf32>
    %37 = vector.extract_strided_slice %9 {offsets = [0, 0], sizes = [1, 128], strides = [1, 1]} : vector<4x128xf32> to vector<1x128xf32>
    %38 = arith.addf %36, %37 : vector<1x128xf32>
    %39 = vector.extract_strided_slice %8 {offsets = [32, 0], sizes = [32, 128], strides = [1, 1]} : vector<128x128xf32> to vector<32x128xf32>
    %40 = arith.mulf %39, %32 : vector<32x128xf32>
    %cst_7 = arith.constant dense<0.000000e+00> : vector<128xf32>
    %41 = vector.multi_reduction <add>, %40, %cst_7 [0] : vector<32x128xf32> to vector<128xf32>
    %42 = vector.shape_cast %41 : vector<128xf32> to vector<1x128xf32>
    %43 = vector.extract_strided_slice %9 {offsets = [1, 0], sizes = [1, 128], strides = [1, 1]} : vector<4x128xf32> to vector<1x128xf32>
    %44 = arith.addf %42, %43 : vector<1x128xf32>
    %45 = vector.extract_strided_slice %8 {offsets = [64, 0], sizes = [32, 128], strides = [1, 1]} : vector<128x128xf32> to vector<32x128xf32>
    %46 = arith.mulf %45, %32 : vector<32x128xf32>
    %cst_8 = arith.constant dense<0.000000e+00> : vector<128xf32>
    %47 = vector.multi_reduction <add>, %46, %cst_8 [0] : vector<32x128xf32> to vector<128xf32>
    %48 = vector.shape_cast %47 : vector<128xf32> to vector<1x128xf32>
    %49 = vector.extract_strided_slice %9 {offsets = [2, 0], sizes = [1, 128], strides = [1, 1]} : vector<4x128xf32> to vector<1x128xf32>
    %50 = arith.addf %48, %49 : vector<1x128xf32>
    %51 = vector.extract_strided_slice %8 {offsets = [96, 0], sizes = [32, 128], strides = [1, 1]} : vector<128x128xf32> to vector<32x128xf32>
    %52 = arith.mulf %51, %32 : vector<32x128xf32>
    %cst_9 = arith.constant dense<0.000000e+00> : vector<128xf32>
    %53 = vector.multi_reduction <add>, %52, %cst_9 [0] : vector<32x128xf32> to vector<128xf32>
    %54 = vector.shape_cast %53 : vector<128xf32> to vector<1x128xf32>
    %55 = vector.extract_strided_slice %9 {offsets = [3, 0], sizes = [1, 128], strides = [1, 1]} : vector<4x128xf32> to vector<1x128xf32>
    %56 = arith.addf %54, %55 : vector<1x128xf32>
    %57 = vector.extract_strided_slice %5 {offsets = [0, 0], sizes = [32, 128], strides = [1, 1]} : vector<128x128xf32> to vector<32x128xf32>
    %58 = vector.extract_strided_slice %10 {offsets = [4, 0], sizes = [1, 128], strides = [1, 1]} : vector<16x128xf32> to vector<1x128xf32>
    %59 = vector.broadcast %58 : vector<1x128xf32> to vector<32x128xf32>
    %60 = arith.mulf %57, %59 : vector<32x128xf32>
    %61 = arith.addf %6, %60 : vector<32x128xf32>
    %62 = vector.extract_strided_slice %5 {offsets = [32, 0], sizes = [32, 128], strides = [1, 1]} : vector<128x128xf32> to vector<32x128xf32>
    %63 = vector.extract_strided_slice %10 {offsets = [5, 0], sizes = [1, 128], strides = [1, 1]} : vector<16x128xf32> to vector<1x128xf32>
    %64 = vector.broadcast %63 : vector<1x128xf32> to vector<32x128xf32>
    %65 = arith.mulf %62, %64 : vector<32x128xf32>
    %66 = arith.addf %61, %65 : vector<32x128xf32>
    %67 = vector.extract_strided_slice %5 {offsets = [64, 0], sizes = [32, 128], strides = [1, 1]} : vector<128x128xf32> to vector<32x128xf32>
    %68 = vector.extract_strided_slice %10 {offsets = [6, 0], sizes = [1, 128], strides = [1, 1]} : vector<16x128xf32> to vector<1x128xf32>
    %69 = vector.broadcast %68 : vector<1x128xf32> to vector<32x128xf32>
    %70 = arith.mulf %67, %69 : vector<32x128xf32>
    %71 = arith.addf %66, %70 : vector<32x128xf32>
    %72 = vector.extract_strided_slice %5 {offsets = [96, 0], sizes = [32, 128], strides = [1, 1]} : vector<128x128xf32> to vector<32x128xf32>
    %73 = vector.extract_strided_slice %10 {offsets = [7, 0], sizes = [1, 128], strides = [1, 1]} : vector<16x128xf32> to vector<1x128xf32>
    %74 = vector.broadcast %73 : vector<1x128xf32> to vector<32x128xf32>
    %75 = arith.mulf %72, %74 : vector<32x128xf32>
    %76 = arith.addf %71, %75 : vector<32x128xf32>
    %cst_10 = arith.constant 0.000000e+00 : f32
    %77 = vector.broadcast %cst_10 : f32 to vector<32x128xf32>
    %78 = arith.maximumf %76, %77 : vector<32x128xf32>
    %79 = vector.extract_strided_slice %8 {offsets = [0, 0], sizes = [32, 128], strides = [1, 1]} : vector<128x128xf32> to vector<32x128xf32>
    %80 = arith.mulf %79, %78 : vector<32x128xf32>
    %cst_11 = arith.constant dense<0.000000e+00> : vector<128xf32>
    %81 = vector.multi_reduction <add>, %80, %cst_11 [0] : vector<32x128xf32> to vector<128xf32>
    %82 = vector.shape_cast %81 : vector<128xf32> to vector<1x128xf32>
    %83 = vector.extract_strided_slice %9 {offsets = [0, 0], sizes = [1, 128], strides = [1, 1]} : vector<4x128xf32> to vector<1x128xf32>
    %84 = arith.addf %82, %83 : vector<1x128xf32>
    %85 = vector.extract_strided_slice %8 {offsets = [32, 0], sizes = [32, 128], strides = [1, 1]} : vector<128x128xf32> to vector<32x128xf32>
    %86 = arith.mulf %85, %78 : vector<32x128xf32>
    %cst_12 = arith.constant dense<0.000000e+00> : vector<128xf32>
    %87 = vector.multi_reduction <add>, %86, %cst_12 [0] : vector<32x128xf32> to vector<128xf32>
    %88 = vector.shape_cast %87 : vector<128xf32> to vector<1x128xf32>
    %89 = vector.extract_strided_slice %9 {offsets = [1, 0], sizes = [1, 128], strides = [1, 1]} : vector<4x128xf32> to vector<1x128xf32>
    %90 = arith.addf %88, %89 : vector<1x128xf32>
    %91 = vector.extract_strided_slice %8 {offsets = [64, 0], sizes = [32, 128], strides = [1, 1]} : vector<128x128xf32> to vector<32x128xf32>
    %92 = arith.mulf %91, %78 : vector<32x128xf32>
    %cst_13 = arith.constant dense<0.000000e+00> : vector<128xf32>
    %93 = vector.multi_reduction <add>, %92, %cst_13 [0] : vector<32x128xf32> to vector<128xf32>
    %94 = vector.shape_cast %93 : vector<128xf32> to vector<1x128xf32>
    %95 = vector.extract_strided_slice %9 {offsets = [2, 0], sizes = [1, 128], strides = [1, 1]} : vector<4x128xf32> to vector<1x128xf32>
    %96 = arith.addf %94, %95 : vector<1x128xf32>
    %97 = vector.extract_strided_slice %8 {offsets = [96, 0], sizes = [32, 128], strides = [1, 1]} : vector<128x128xf32> to vector<32x128xf32>
    %98 = arith.mulf %97, %78 : vector<32x128xf32>
    %cst_14 = arith.constant dense<0.000000e+00> : vector<128xf32>
    %99 = vector.multi_reduction <add>, %98, %cst_14 [0] : vector<32x128xf32> to vector<128xf32>
    %100 = vector.shape_cast %99 : vector<128xf32> to vector<1x128xf32>
    %101 = vector.extract_strided_slice %9 {offsets = [3, 0], sizes = [1, 128], strides = [1, 1]} : vector<4x128xf32> to vector<1x128xf32>
    %102 = arith.addf %100, %101 : vector<1x128xf32>
    %103 = vector.extract_strided_slice %5 {offsets = [0, 0], sizes = [32, 128], strides = [1, 1]} : vector<128x128xf32> to vector<32x128xf32>
    %104 = vector.extract_strided_slice %10 {offsets = [8, 0], sizes = [1, 128], strides = [1, 1]} : vector<16x128xf32> to vector<1x128xf32>
    %105 = vector.broadcast %104 : vector<1x128xf32> to vector<32x128xf32>
    %106 = arith.mulf %103, %105 : vector<32x128xf32>
    %107 = arith.addf %6, %106 : vector<32x128xf32>
    %108 = vector.extract_strided_slice %5 {offsets = [32, 0], sizes = [32, 128], strides = [1, 1]} : vector<128x128xf32> to vector<32x128xf32>
    %109 = vector.extract_strided_slice %10 {offsets = [9, 0], sizes = [1, 128], strides = [1, 1]} : vector<16x128xf32> to vector<1x128xf32>
    %110 = vector.broadcast %109 : vector<1x128xf32> to vector<32x128xf32>
    %111 = arith.mulf %108, %110 : vector<32x128xf32>
    %112 = arith.addf %107, %111 : vector<32x128xf32>
    %113 = vector.extract_strided_slice %5 {offsets = [64, 0], sizes = [32, 128], strides = [1, 1]} : vector<128x128xf32> to vector<32x128xf32>
    %114 = vector.extract_strided_slice %10 {offsets = [10, 0], sizes = [1, 128], strides = [1, 1]} : vector<16x128xf32> to vector<1x128xf32>
    %115 = vector.broadcast %114 : vector<1x128xf32> to vector<32x128xf32>
    %116 = arith.mulf %113, %115 : vector<32x128xf32>
    %117 = arith.addf %112, %116 : vector<32x128xf32>
    %118 = vector.extract_strided_slice %5 {offsets = [96, 0], sizes = [32, 128], strides = [1, 1]} : vector<128x128xf32> to vector<32x128xf32>
    %119 = vector.extract_strided_slice %10 {offsets = [11, 0], sizes = [1, 128], strides = [1, 1]} : vector<16x128xf32> to vector<1x128xf32>
    %120 = vector.broadcast %119 : vector<1x128xf32> to vector<32x128xf32>
    %121 = arith.mulf %118, %120 : vector<32x128xf32>
    %122 = arith.addf %117, %121 : vector<32x128xf32>
    %cst_15 = arith.constant 0.000000e+00 : f32
    %123 = vector.broadcast %cst_15 : f32 to vector<32x128xf32>
    %124 = arith.maximumf %122, %123 : vector<32x128xf32>
    %125 = vector.extract_strided_slice %8 {offsets = [0, 0], sizes = [32, 128], strides = [1, 1]} : vector<128x128xf32> to vector<32x128xf32>
    %126 = arith.mulf %125, %124 : vector<32x128xf32>
    %cst_16 = arith.constant dense<0.000000e+00> : vector<128xf32>
    %127 = vector.multi_reduction <add>, %126, %cst_16 [0] : vector<32x128xf32> to vector<128xf32>
    %128 = vector.shape_cast %127 : vector<128xf32> to vector<1x128xf32>
    %129 = vector.extract_strided_slice %9 {offsets = [0, 0], sizes = [1, 128], strides = [1, 1]} : vector<4x128xf32> to vector<1x128xf32>
    %130 = arith.addf %128, %129 : vector<1x128xf32>
    %131 = vector.extract_strided_slice %8 {offsets = [32, 0], sizes = [32, 128], strides = [1, 1]} : vector<128x128xf32> to vector<32x128xf32>
    %132 = arith.mulf %131, %124 : vector<32x128xf32>
    %cst_17 = arith.constant dense<0.000000e+00> : vector<128xf32>
    %133 = vector.multi_reduction <add>, %132, %cst_17 [0] : vector<32x128xf32> to vector<128xf32>
    %134 = vector.shape_cast %133 : vector<128xf32> to vector<1x128xf32>
    %135 = vector.extract_strided_slice %9 {offsets = [1, 0], sizes = [1, 128], strides = [1, 1]} : vector<4x128xf32> to vector<1x128xf32>
    %136 = arith.addf %134, %135 : vector<1x128xf32>
    %137 = vector.extract_strided_slice %8 {offsets = [64, 0], sizes = [32, 128], strides = [1, 1]} : vector<128x128xf32> to vector<32x128xf32>
    %138 = arith.mulf %137, %124 : vector<32x128xf32>
    %cst_18 = arith.constant dense<0.000000e+00> : vector<128xf32>
    %139 = vector.multi_reduction <add>, %138, %cst_18 [0] : vector<32x128xf32> to vector<128xf32>
    %140 = vector.shape_cast %139 : vector<128xf32> to vector<1x128xf32>
    %141 = vector.extract_strided_slice %9 {offsets = [2, 0], sizes = [1, 128], strides = [1, 1]} : vector<4x128xf32> to vector<1x128xf32>
    %142 = arith.addf %140, %141 : vector<1x128xf32>
    %143 = vector.extract_strided_slice %8 {offsets = [96, 0], sizes = [32, 128], strides = [1, 1]} : vector<128x128xf32> to vector<32x128xf32>
    %144 = arith.mulf %143, %124 : vector<32x128xf32>
    %cst_19 = arith.constant dense<0.000000e+00> : vector<128xf32>
    %145 = vector.multi_reduction <add>, %144, %cst_19 [0] : vector<32x128xf32> to vector<128xf32>
    %146 = vector.shape_cast %145 : vector<128xf32> to vector<1x128xf32>
    %147 = vector.extract_strided_slice %9 {offsets = [3, 0], sizes = [1, 128], strides = [1, 1]} : vector<4x128xf32> to vector<1x128xf32>
    %148 = arith.addf %146, %147 : vector<1x128xf32>
    %149 = vector.extract_strided_slice %5 {offsets = [0, 0], sizes = [32, 128], strides = [1, 1]} : vector<128x128xf32> to vector<32x128xf32>
    %150 = vector.extract_strided_slice %10 {offsets = [12, 0], sizes = [1, 128], strides = [1, 1]} : vector<16x128xf32> to vector<1x128xf32>
    %151 = vector.broadcast %150 : vector<1x128xf32> to vector<32x128xf32>
    %152 = arith.mulf %149, %151 : vector<32x128xf32>
    %153 = arith.addf %6, %152 : vector<32x128xf32>
    %154 = vector.extract_strided_slice %5 {offsets = [32, 0], sizes = [32, 128], strides = [1, 1]} : vector<128x128xf32> to vector<32x128xf32>
    %155 = vector.extract_strided_slice %10 {offsets = [13, 0], sizes = [1, 128], strides = [1, 1]} : vector<16x128xf32> to vector<1x128xf32>
    %156 = vector.broadcast %155 : vector<1x128xf32> to vector<32x128xf32>
    %157 = arith.mulf %154, %156 : vector<32x128xf32>
    %158 = arith.addf %153, %157 : vector<32x128xf32>
    %159 = vector.extract_strided_slice %5 {offsets = [64, 0], sizes = [32, 128], strides = [1, 1]} : vector<128x128xf32> to vector<32x128xf32>
    %160 = vector.extract_strided_slice %10 {offsets = [14, 0], sizes = [1, 128], strides = [1, 1]} : vector<16x128xf32> to vector<1x128xf32>
    %161 = vector.broadcast %160 : vector<1x128xf32> to vector<32x128xf32>
    %162 = arith.mulf %159, %161 : vector<32x128xf32>
    %163 = arith.addf %158, %162 : vector<32x128xf32>
    %164 = vector.extract_strided_slice %5 {offsets = [96, 0], sizes = [32, 128], strides = [1, 1]} : vector<128x128xf32> to vector<32x128xf32>
    %165 = vector.extract_strided_slice %10 {offsets = [15, 0], sizes = [1, 128], strides = [1, 1]} : vector<16x128xf32> to vector<1x128xf32>
    %166 = vector.broadcast %165 : vector<1x128xf32> to vector<32x128xf32>
    %167 = arith.mulf %164, %166 : vector<32x128xf32>
    %168 = arith.addf %163, %167 : vector<32x128xf32>
    %cst_20 = arith.constant 0.000000e+00 : f32
    %169 = vector.broadcast %cst_20 : f32 to vector<32x128xf32>
    %170 = arith.maximumf %168, %169 : vector<32x128xf32>
    %171 = vector.extract_strided_slice %8 {offsets = [0, 0], sizes = [32, 128], strides = [1, 1]} : vector<128x128xf32> to vector<32x128xf32>
    %172 = arith.mulf %171, %170 : vector<32x128xf32>
    %cst_21 = arith.constant dense<0.000000e+00> : vector<128xf32>
    %173 = vector.multi_reduction <add>, %172, %cst_21 [0] : vector<32x128xf32> to vector<128xf32>
    %174 = vector.shape_cast %173 : vector<128xf32> to vector<1x128xf32>
    %175 = vector.extract_strided_slice %9 {offsets = [0, 0], sizes = [1, 128], strides = [1, 1]} : vector<4x128xf32> to vector<1x128xf32>
    %176 = arith.addf %174, %175 : vector<1x128xf32>
    %177 = vector.extract_strided_slice %8 {offsets = [32, 0], sizes = [32, 128], strides = [1, 1]} : vector<128x128xf32> to vector<32x128xf32>
    %178 = arith.mulf %177, %170 : vector<32x128xf32>
    %cst_22 = arith.constant dense<0.000000e+00> : vector<128xf32>
    %179 = vector.multi_reduction <add>, %178, %cst_22 [0] : vector<32x128xf32> to vector<128xf32>
    %180 = vector.shape_cast %179 : vector<128xf32> to vector<1x128xf32>
    %181 = vector.extract_strided_slice %9 {offsets = [1, 0], sizes = [1, 128], strides = [1, 1]} : vector<4x128xf32> to vector<1x128xf32>
    %182 = arith.addf %180, %181 : vector<1x128xf32>
    %183 = vector.extract_strided_slice %8 {offsets = [64, 0], sizes = [32, 128], strides = [1, 1]} : vector<128x128xf32> to vector<32x128xf32>
    %184 = arith.mulf %183, %170 : vector<32x128xf32>
    %cst_23 = arith.constant dense<0.000000e+00> : vector<128xf32>
    %185 = vector.multi_reduction <add>, %184, %cst_23 [0] : vector<32x128xf32> to vector<128xf32>
    %186 = vector.shape_cast %185 : vector<128xf32> to vector<1x128xf32>
    %187 = vector.extract_strided_slice %9 {offsets = [2, 0], sizes = [1, 128], strides = [1, 1]} : vector<4x128xf32> to vector<1x128xf32>
    %188 = arith.addf %186, %187 : vector<1x128xf32>
    %189 = vector.extract_strided_slice %8 {offsets = [96, 0], sizes = [32, 128], strides = [1, 1]} : vector<128x128xf32> to vector<32x128xf32>
    %190 = arith.mulf %189, %170 : vector<32x128xf32>
    %cst_24 = arith.constant dense<0.000000e+00> : vector<128xf32>
    %191 = vector.multi_reduction <add>, %190, %cst_24 [0] : vector<32x128xf32> to vector<128xf32>
    %192 = vector.shape_cast %191 : vector<128xf32> to vector<1x128xf32>
    %193 = vector.extract_strided_slice %9 {offsets = [3, 0], sizes = [1, 128], strides = [1, 1]} : vector<4x128xf32> to vector<1x128xf32>
    %194 = arith.addf %192, %193 : vector<1x128xf32>
    %195 = tpu.concatenate %38, %44, %50, %56, %84, %90, %96, %102, %130, %136, %142, %148, %176, %182, %188, %194 in 0 : vector<1x128xf32>, vector<1x128xf32>, vector<1x128xf32>, vector<1x128xf32>, vector<1x128xf32>, vector<1x128xf32>, vector<1x128xf32>, vector<1x128xf32>, vector<1x128xf32>, vector<1x128xf32>, vector<1x128xf32>, vector<1x128xf32>, vector<1x128xf32>, vector<1x128xf32>, vector<1x128xf32>, vector<1x128xf32> -> vector<16x128xf32>
    %c0_25 = arith.constant 0 : index
    %c0_26 = arith.constant 0 : index
    %196 = vector.load %arg4[%c0_25, %c0_26] : memref<16x128xf32, #tpu.memory_space<vmem>>, vector<16x128xf32>
    tpu.vector_store %arg4[%c0_25, %c0_26], %195 {strides = array<i32>} : memref<16x128xf32, #tpu.memory_space<vmem>>, vector<16x128xf32>,
    return
  }
  func.func @transform_0(%arg0: i32) -> (i32, i32) {
    %c0_i32 = arith.constant 0 : i32
    %c0_i32_0 = arith.constant 0 : i32
    return %c0_i32, %arg0 : i32, i32
  }
  func.func @transform_1(%arg0: i32) -> (i32, i32) {
    %c0_i32 = arith.constant 0 : i32
    %c0_i32_0 = arith.constant 0 : i32
    return %c0_i32, %arg0 : i32, i32
  }
  func.func @transform_2(%arg0: i32) -> (i32, i32) {
    %c0_i32 = arith.constant 0 : i32
    %c0_i32_0 = arith.constant 0 : i32
    %c0_i32_1 = arith.constant 0 : i32
    return %c0_i32, %c0_i32_0 : i32, i32
  }
  func.func @transform_3(%arg0: i32) -> (i32, i32) {
    %c0_i32 = arith.constant 0 : i32
    %c0_i32_0 = arith.constant 0 : i32
    return %c0_i32, %arg0 : i32, i32
  }
}

</mosaic_0001>

<llo_original>
// kernel: _qmix_forward_impl.1
$region0: #{_qmix_forward_impl.1}
  #allocation0 [shape = 'u32[]', space=smem, size = 0x4, offset = 0x4, fixed_abs, tag = 'smem constant byte address 0x4 - core index']
  #allocation1 [shape = 'u32[144,128]{1,0:T(1,128)}', space=vmem, size = 0x12000, scoped, tag = 'internal scratch']
  %s0 = inlined_call_operand.vmem [shape: f32[17,128], index: 0, kind: input, shape index: {}]
  %s1 = inlined_call_operand.vmem [shape: f32[16,128], index: 1, kind: input, shape index: {}]
  %s2 = inlined_call_operand.vmem [shape: bf16[296,17], index: 2, kind: input, shape index: {}]
  %s3 = inlined_call_operand.vmem [shape: f32[16,128], index: 3, kind: output, shape index: {}]
  %s4 = sld [smem:[#allocation0]]
  $region22: #{_qmix_forward_impl.1} parent=0
    _
  %s6 = ssub.s32 1, %s4
  %s7 = scalar_select 0, %s6, %s4
  // Predicated region
  $region2: #{_qmix_forward_impl.1} parent=0 // pred_check
    _
  $region3: #{_qmix_forward_impl.1} parent=0 // pred_check_branch
    %9 = sbr.rel (0) target = $region5
  $region4: #{_qmix_forward_impl.1} parent=0 // pred_region
    _
  $region5: #{_qmix_forward_impl.1} parent=0 // pred_fallthru
    _
  // Predicated region
  $region6: #{_qmix_forward_impl.1} parent=0 // pred_check
    _
  $region7: #{_qmix_forward_impl.1} parent=0 // pred_check_branch
    %11 = sbr.rel (0) target = $region9
  $region8: #{_qmix_forward_impl.1} parent=0 // pred_region
    _
  $region9: #{_qmix_forward_impl.1} parent=0 // pred_fallthru
    _
  // Predicated region
  $region10: #{_qmix_forward_impl.1} parent=0 // pred_check
    _
  $region11: #{_qmix_forward_impl.1} parent=0 // pred_check_branch
    %13 = sbr.rel (0) target = $region13
  $region12: #{_qmix_forward_impl.1} parent=0 // pred_region
    _
  $region13: #{_qmix_forward_impl.1} parent=0 // pred_fallthru
    _
  %v15 = vld [vmem:[%s0] sm:$0xff]
  %v16 = vld [vmem:[%s0 + $0x8] sm:$0xff]
  %v17 = vld [vmem:[%s0 + $0x10] sm:$0x1]
  %v18 = vpack.c.bf16 %v16, %v15
  %v19 = vpack.c.bf16 %v17, %v17
  %v20 = vld [vmem:[%s2] sm:$0xf]
  %v21 = vld [vmem:[%s2 + $0x4] sm:$0xf]
  %v22 = vld [vmem:[%s2 + $0x8] sm:$0xf]
  %v23 = vld [vmem:[%s2 + $0xc] sm:$0xf]
  %v24 = vld [vmem:[%s2 + $0x10] sm:$0xf]
  %v25 = vld [vmem:[%s2 + $0x14] sm:$0xf]
  %v26 = vld [vmem:[%s2 + $0x18] sm:$0xf]
  %v27 = vld [vmem:[%s2 + $0x1c] sm:$0xf]
  %v28 = vld [vmem:[%s2 + $0x20] sm:$0xf]
  %v29 = vld [vmem:[%s2 + $0x24] sm:$0xf]
  %v30 = vld [vmem:[%s2 + $0x28] sm:$0xf]
  %v31 = vld [vmem:[%s2 + $0x2c] sm:$0xf]
  %v32 = vld [vmem:[%s2 + $0x30] sm:$0xf]
  %v33 = vld [vmem:[%s2 + $0x34] sm:$0xf]
  %v34 = vld [vmem:[%s2 + $0x38] sm:$0xf]
  %v35 = vld [vmem:[%s2 + $0x3c] sm:$0xf]
  %v36 = vld [vmem:[%s2 + $0x40] sm:$0xf]
  %v37 = vld [vmem:[%s2 + $0x44] sm:$0xf]
  %v38 = vld [vmem:[%s2 + $0x48] sm:$0xf]
  %v39 = vld [vmem:[%s2 + $0x4c] sm:$0xf]
  %v40 = vld [vmem:[%s2 + $0x50] sm:$0xf]
  %v41 = vld [vmem:[%s2 + $0x54] sm:$0xf]
  %v42 = vld [vmem:[%s2 + $0x58] sm:$0xf]
  %v43 = vld [vmem:[%s2 + $0x5c] sm:$0xf]
  %v44 = vld [vmem:[%s2 + $0x60] sm:$0xf]
  %v45 = vld [vmem:[%s2 + $0x64] sm:$0xf]
  %v46 = vld [vmem:[%s2 + $0x68] sm:$0xf]
  %v47 = vld [vmem:[%s2 + $0x6c] sm:$0xf]
  %v48 = vld [vmem:[%s2 + $0x70] sm:$0xf]
  %v49 = vld [vmem:[%s2 + $0x74] sm:$0xf]
  %v50 = vld [vmem:[%s2 + $0x78] sm:$0xf]
  %v51 = vld [vmem:[%s2 + $0x7c] sm:$0xf]
  %v52 = vld [vmem:[%s2 + $0x80] sm:$0xf]
  %v53 = vld [vmem:[%s2 + $0x84] sm:$0xf]
  %v54 = vld [vmem:[%s2 + $0x88] sm:$0xf]
  %v55 = vld [vmem:[%s2 + $0x8c] sm:$0xf]
  %v56 = vld [vmem:[%s2 + $0x90] sm:$0xf]
  %v94 = vunpack.c.l.b16 %v20
  %v95 = vunpack.c.l.b16 %v21
  %v96 = vunpack.c.l.b16 %v22
  %v97 = vunpack.c.l.b16 %v23
  %v98 = vunpack.c.l.b16 %v24
  %v99 = vunpack.c.l.b16 %v25
  %v100 = vunpack.c.l.b16 %v26
  %v101 = vunpack.c.l.b16 %v27
  %v102 = vunpack.c.l.b16 %v28
  %v103 = vunpack.c.l.b16 %v29
  %v104 = vunpack.c.l.b16 %v30
  %v105 = vunpack.c.l.b16 %v31
  %v106 = vunpack.c.l.b16 %v32
  %v107 = vunpack.c.l.b16 %v33
  %v108 = vunpack.c.l.b16 %v34
  %v109 = vunpack.c.l.b16 %v35
  %v110 = vunpack.c.l.b16 %v36
  %v111 = vunpack.c.l.b16 %v37
  %v112 = vunpack.c.l.b16 %v38
  %v113 = vunpack.c.l.b16 %v39
  %v114 = vunpack.c.l.b16 %v40
  %v115 = vunpack.c.l.b16 %v41
  %v116 = vunpack.c.l.b16 %v42
  %v117 = vunpack.c.l.b16 %v43
  %v118 = vunpack.c.l.b16 %v44
  %v119 = vunpack.c.l.b16 %v45
  %v120 = vunpack.c.l.b16 %v46
  %v121 = vunpack.c.l.b16 %v47
  %v122 = vunpack.c.l.b16 %v48
  %v123 = vunpack.c.l.b16 %v49
  %v124 = vunpack.c.l.b16 %v50
  %v125 = vunpack.c.l.b16 %v51
  %v126 = vunpack.c.l.b16 %v52
  %v127 = vunpack.c.l.b16 %v53
  %v128 = vunpack.c.l.b16 %v54
  %v129 = vunpack.c.l.b16 %v55
  %v130 = vunpack.c.l.b16 %v56
  %v131 = vpack.c.b16 %v95, %v94
  %v132 = vpack.c.b16 %v97, %v96
  %v133 = vpack.c.b16 %v99, %v98
  %v134 = vpack.c.b16 %v101, %v100
  %v135 = vpack.c.b16 %v103, %v102
  %v136 = vpack.c.b16 %v105, %v104
  %v137 = vpack.c.b16 %v107, %v106
  %v138 = vpack.c.b16 %v109, %v108
  %v139 = vpack.c.b16 %v111, %v110
  %v140 = vpack.c.b16 %v113, %v112
  %v141 = vpack.c.b16 %v115, %v114
  %v142 = vpack.c.b16 %v117, %v116
  %v143 = vpack.c.b16 %v119, %v118
  %v144 = vpack.c.b16 %v121, %v120
  %v145 = vpack.c.b16 %v123, %v122
  %v146 = vpack.c.b16 %v125, %v124
  %v147 = vpack.c.b16 %v127, %v126
  %v148 = vpack.c.b16 %v129, %v128
  %v149 = vpack.c.b16 %v130, %v130
  %vm150 = vcmask 138240
  %v152 = vsel %vm150, %v131, 0
  %v155 = vsel %vm150, %v132, 0
  %v158 = vsel %vm150, %v133, 0
  %v161 = vsel %vm150, %v134, 0
  %v164 = vsel %vm150, %v135, 0
  %v167 = vsel %vm150, %v136, 0
  %v170 = vsel %vm150, %v137, 0
  %v173 = vsel %vm150, %v138, 0
  %v176 = vsel %vm150, %v139, 0
  %v179 = vsel %vm150, %v140, 0
  %v182 = vsel %vm150, %v141, 0
  %v185 = vsel %vm150, %v142, 0
  %v188 = vsel %vm150, %v143, 0
  %v191 = vsel %vm150, %v144, 0
  %v194 = vsel %vm150, %v145, 0
  %v197 = vsel %vm150, %v146, 0
  %v200 = vsel %vm150, %v147, 0
  %v203 = vsel %vm150, %v148, 0
  %v206 = vsel %vm150, %v149, 0
  %vm208 = vcmask 1040384
  %v209 = vsel 0, 4294967295, 65535
  %v210 = vsel %vm208, %v209, 0
  %v212 = vand.u32 %v19, %v210
  %214 = vmatprep.subr.bf16.mxu0 0
  %215 = vmatpush1.bf16.msra.mxu0 0
  %216 = vmatprep.subr.bf16.mxu0 0
  %217 = vmatpush1.bf16.msra.mxu0 0
  %218 = vmatprep.subr.bf16.mxu0 0
  %219 = vmatpush1.bf16.msra.mxu0 0
  %220 = vmatprep.subr.bf16.mxu0 0
  %221 = vmatpush1.bf16.msra.mxu0 0
  %222 = vmatprep.subr.bf16.mxu0 0
  %223 = vmatpush1.bf16.msra.mxu0 0
  %224 = vmatprep.subr.bf16.mxu0 0
  %225 = vmatpush1.bf16.msra.mxu0 0
  %226 = vmatprep.subr.bf16.mxu0 0
  %227 = vmatpush1.bf16.msra.mxu0 %v212
  %228 = vmatprep.subr.bf16.mxu0 0
  %229 = vmatpush1.bf16.msra.mxu0 %v18
  %230 = vmatprep.subr.bf16.mxu0 0
  %231 = vmatpush2.bf16.msra.mxu0 0
  %232 = vmatprep.subr.bf16.mxu0 0
  %233 = vmatpush2.bf16.msra.mxu0 0
  %234 = vmatprep.subr.bf16.mxu0 0
  %235 = vmatpush2.bf16.msra.mxu0 0
  %236 = vmatprep.subr.bf16.mxu0 0
  %237 = vmatpush2.bf16.msra.mxu0 0
  %238 = vmatprep.subr.bf16.mxu0 0
  %239 = vmatpush2.bf16.msra.mxu0 0
  %240 = vmatprep.subr.bf16.mxu0 0
  %241 = vmatpush2.bf16.msra.mxu0 0
  %242 = vmatprep.subr.bf16.mxu0 0
  %243 = vmatpush2.bf16.msra.mxu0 0
  %244 = vmatprep.subr.bf16.mxu0 0
  %245 = vmatpush2.bf16.msra.mxu0 0
  %246 = vmatprep.mubr.bf16.mxu0 0
  %247 = vmatmul.mubr.bf16.gmra.mxu0 %v152
  %v248 = vpop.f32.mrf.mxu0
  %v249 = vadd.f32 0.0, %v248
  %v250 = vpop.f32.mrf.mxu0
  %v251 = vpop.f32.mrf.mxu0
  %v252 = vadd.f32 0.0, %v251
  %v253 = vpop.f32.mrf.mxu0
  %254 = vmatprep.mubr.bf16.mxu0 0
  %255 = vmatmul.mubr.bf16.gmra.mxu0 %v155
  %v256 = vpop.f32.mrf.mxu0
  %v257 = vadd.f32 0.0, %v256
  %v258 = vpop.f32.mrf.mxu0
  %v259 = vpop.f32.mrf.mxu0
  %v260 = vadd.f32 0.0, %v259
  %v261 = vpop.f32.mrf.mxu0
  %262 = vmatprep.mubr.bf16.mxu0 0
  %263 = vmatmul.mubr.bf16.gmra.mxu0 %v158
  %v264 = vpop.f32.mrf.mxu0
  %v265 = vadd.f32 0.0, %v264
  %v266 = vpop.f32.mrf.mxu0
  %v267 = vpop.f32.mrf.mxu0
  %v268 = vadd.f32 0.0, %v267
  %v269 = vpop.f32.mrf.mxu0
  %270 = vmatprep.mubr.bf16.mxu0 0
  %271 = vmatmul.mubr.bf16.gmra.mxu0 %v161
  %v272 = vpop.f32.mrf.mxu0
  %v273 = vadd.f32 0.0, %v272
  %v274 = vpop.f32.mrf.mxu0
  %v275 = vpop.f32.mrf.mxu0
  %v276 = vadd.f32 0.0, %v275
  %v277 = vpop.f32.mrf.mxu0
  %278 = vmatprep.mubr.bf16.mxu0 0
  %279 = vmatmul.mubr.bf16.gmra.mxu0 %v164
  %v280 = vpop.f32.mrf.mxu0
  %v281 = vadd.f32 0.0, %v280
  %v282 = vpop.f32.mrf.mxu0
  %v283 = vpop.f32.mrf.mxu0
  %v284 = vadd.f32 0.0, %v283
  %v285 = vpop.f32.mrf.mxu0
  %286 = vmatprep.mubr.bf16.mxu0 0
  %287 = vmatmul.mubr.bf16.gmra.mxu0 %v167
  %v288 = vpop.f32.mrf.mxu0
  %v289 = vadd.f32 0.0, %v288
  %v290 = vpop.f32.mrf.mxu0
  %v291 = vpop.f32.mrf.mxu0
  %v292 = vadd.f32 0.0, %v291
  %v293 = vpop.f32.mrf.mxu0
  %294 = vmatprep.mubr.bf16.mxu0 0
  %295 = vmatmul.mubr.bf16.gmra.mxu0 %v170
  %v296 = vpop.f32.mrf.mxu0
  %v297 = vadd.f32 0.0, %v296
  %v298 = vpop.f32.mrf.mxu0
  %v299 = vpop.f32.mrf.mxu0
  %v300 = vadd.f32 0.0, %v299
  %v301 = vpop.f32.mrf.mxu0
  %302 = vmatprep.mubr.bf16.mxu0 0
  %303 = vmatmul.mubr.bf16.gmra.mxu0 %v173
  %v304 = vpop.f32.mrf.mxu0
  %v305 = vadd.f32 0.0, %v304
  %v306 = vpop.f32.mrf.mxu0
  %v307 = vpop.f32.mrf.mxu0
  %v308 = vadd.f32 0.0, %v307
  %v309 = vpop.f32.mrf.mxu0
  %310 = vmatprep.mubr.bf16.mxu0 0
  %311 = vmatmul.mubr.bf16.gmra.mxu0 %v176
  %v312 = vpop.f32.mrf.mxu0
  %v313 = vadd.f32 0.0, %v312
  %v314 = vpop.f32.mrf.mxu0
  %v315 = vpop.f32.mrf.mxu0
  %v316 = vadd.f32 0.0, %v315
  %v317 = vpop.f32.mrf.mxu0
  %318 = vmatprep.mubr.bf16.mxu0 0
  %319 = vmatmul.mubr.bf16.gmra.mxu0 %v179
  %v320 = vpop.f32.mrf.mxu0
  %v321 = vadd.f32 0.0, %v320
  %v322 = vpop.f32.mrf.mxu0
  %v323 = vpop.f32.mrf.mxu0
  %v324 = vadd.f32 0.0, %v323
  %v325 = vpop.f32.mrf.mxu0
  %326 = vmatprep.mubr.bf16.mxu0 0
  %327 = vmatmul.mubr.bf16.gmra.mxu0 %v182
  %v328 = vpop.f32.mrf.mxu0
  %v329 = vadd.f32 0.0, %v328
  %v330 = vpop.f32.mrf.mxu0
  %v331 = vpop.f32.mrf.mxu0
  %v332 = vadd.f32 0.0, %v331
  %v333 = vpop.f32.mrf.mxu0
  %334 = vmatprep.mubr.bf16.mxu0 0
  %335 = vmatmul.mubr.bf16.gmra.mxu0 %v185
  %v336 = vpop.f32.mrf.mxu0
  %v337 = vadd.f32 0.0, %v336
  %v338 = vpop.f32.mrf.mxu0
  %v339 = vpop.f32.mrf.mxu0
  %v340 = vadd.f32 0.0, %v339
  %v341 = vpop.f32.mrf.mxu0
  %342 = vmatprep.mubr.bf16.mxu0 0
  %343 = vmatmul.mubr.bf16.gmra.mxu0 %v188
  %v344 = vpop.f32.mrf.mxu0
  %v345 = vadd.f32 0.0, %v344
  %v346 = vpop.f32.mrf.mxu0
  %v347 = vpop.f32.mrf.mxu0
  %v348 = vadd.f32 0.0, %v347
  %v349 = vpop.f32.mrf.mxu0
  %350 = vmatprep.mubr.bf16.mxu0 0
  %351 = vmatmul.mubr.bf16.gmra.mxu0 %v191
  %v352 = vpop.f32.mrf.mxu0
  %v353 = vadd.f32 0.0, %v352
  %v354 = vpop.f32.mrf.mxu0
  %v355 = vpop.f32.mrf.mxu0
  %v356 = vadd.f32 0.0, %v355
  %v357 = vpop.f32.mrf.mxu0
  %358 = vmatprep.mubr.bf16.mxu0 0
  %359 = vmatmul.mubr.bf16.gmra.mxu0 %v194
  %v360 = vpop.f32.mrf.mxu0
  %v361 = vadd.f32 0.0, %v360
  %v362 = vpop.f32.mrf.mxu0
  %v363 = vpop.f32.mrf.mxu0
  %v364 = vadd.f32 0.0, %v363
  %v365 = vpop.f32.mrf.mxu0
  %366 = vmatprep.mubr.bf16.mxu0 0
  %367 = vmatmul.mubr.bf16.gmra.mxu0 %v197
  %v368 = vpop.f32.mrf.mxu0
  %v369 = vadd.f32 0.0, %v368
  %v370 = vpop.f32.mrf.mxu0
  %v371 = vpop.f32.mrf.mxu0
  %v372 = vadd.f32 0.0, %v371
  %v373 = vpop.f32.mrf.mxu0
  %374 = vmatprep.mubr.bf16.mxu0 0
  %375 = vmatmul.mubr.bf16.gmra.mxu0 %v200
  %v376 = vpop.f32.mrf.mxu0
  %v377 = vadd.f32 0.0, %v376
  %v378 = vpop.f32.mrf.mxu0
  %v379 = vpop.f32.mrf.mxu0
  %v380 = vadd.f32 0.0, %v379
  %v381 = vpop.f32.mrf.mxu0
  %382 = vmatprep.mubr.bf16.mxu0 0
  %383 = vmatmul.mubr.bf16.gmra.mxu0 %v203
  %v384 = vpop.f32.mrf.mxu0
  %v385 = vadd.f32 0.0, %v384
  %v386 = vpop.f32.mrf.mxu0
  %v387 = vpop.f32.mrf.mxu0
  %v388 = vadd.f32 0.0, %v387
  %v389 = vpop.f32.mrf.mxu0
  %390 = vmatprep.mubr.bf16.mxu0 0
  %391 = vmatmul.mubr.bf16.gmra.mxu0 %v206
  %v392 = vpop.f32.mrf.mxu0
  %v393 = vadd.f32 0.0, %v392
  %v394 = vpop.f32.mrf.mxu0
  %v395 = vpop.f32.mrf.mxu0
  %v396 = vpop.f32.mrf.mxu0
  %397 = vdwg.mxu0
  %v398 = vand.u32 2147483647, %v249
  %v399 = vand.u32 2147483647, %v252
  %v400 = vand.u32 2147483647, %v257
  %v401 = vand.u32 2147483647, %v260
  %v402 = vand.u32 2147483647, %v265
  %v403 = vand.u32 2147483647, %v268
  %v404 = vand.u32 2147483647, %v273
  %v405 = vand.u32 2147483647, %v276
  %v406 = vand.u32 2147483647, %v281
  %v407 = vand.u32 2147483647, %v284
  %v408 = vand.u32 2147483647, %v289
  %v409 = vand.u32 2147483647, %v292
  %v410 = vand.u32 2147483647, %v297
  %v411 = vand.u32 2147483647, %v300
  %v412 = vand.u32 2147483647, %v305
  %v413 = vand.u32 2147483647, %v308
  %v414 = vand.u32 2147483647, %v329
  %v415 = vand.u32 2147483647, %v332
  %v416 = vand.u32 2147483647, %v337
  %v417 = vand.u32 2147483647, %v340
  %v418 = vand.u32 2147483647, %v345
  %v419 = vand.u32 2147483647, %v348
  %v420 = vand.u32 2147483647, %v353
  %v421 = vand.u32 2147483647, %v356
  %v422 = vand.u32 2147483647, %v361
  %v423 = vand.u32 2147483647, %v364
  %v424 = vand.u32 2147483647, %v369
  %v425 = vand.u32 2147483647, %v372
  %v426 = vand.u32 2147483647, %v377
  %v427 = vand.u32 2147483647, %v380
  %v428 = vand.u32 2147483647, %v385
  %v429 = vand.u32 2147483647, %v388
  %v430 = vld [vmem:[%s1] sm:$0xff]
  %v431 = vld [vmem:[%s1 + $0x8] sm:$0xff]
  %v432 = vlaneseq
  %v433 = vshrl.u32 %v432, 7
  %v434 = vsub.s32 0, %v433
  %v435 = vrot.slane %v430, %v434
  %v436 = vmul.f32 %v398, %v435
  %v437 = vmul.f32 %v399, %v435
  %v438 = vmul.f32 %v400, %v435
  %v439 = vmul.f32 %v401, %v435
  %v440 = vadd.f32 %v313, %v436
  %v441 = vadd.f32 %v316, %v437
  %v442 = vadd.f32 %v321, %v438
  %v443 = vadd.f32 %v324, %v439
  %v444 = vlaneseq
  %v445 = vshrl.u32 %v444, 7
  %v446 = vsub.s32 1, %v445
  %v447 = vrot.slane %v430, %v446
  %v448 = vmul.f32 %v402, %v447
  %v449 = vmul.f32 %v403, %v447
  %v450 = vmul.f32 %v404, %v447
  %v451 = vmul.f32 %v405, %v447
  %v452 = vadd.f32 %v440, %v448
  %v453 = vadd.f32 %v441, %v449
  %v454 = vadd.f32 %v442, %v450
  %v455 = vadd.f32 %v443, %v451
  %v456 = vlaneseq
  %v457 = vshrl.u32 %v456, 7
  %v458 = vsub.s32 2, %v457
  %v459 = vrot.slane %v430, %v458
  %v460 = vmul.f32 %v406, %v459
  %v461 = vmul.f32 %v407, %v459
  %v462 = vmul.f32 %v408, %v459
  %v463 = vmul.f32 %v409, %v459
  %v464 = vadd.f32 %v452, %v460
  %v465 = vadd.f32 %v453, %v461
  %v466 = vadd.f32 %v454, %v462
  %v467 = vadd.f32 %v455, %v463
  %v468 = vlaneseq
  %v469 = vshrl.u32 %v468, 7
  %v470 = vsub.s32 3, %v469
  %v471 = vrot.slane %v430, %v470
  %v472 = vmul.f32 %v410, %v471
  %v473 = vmul.f32 %v411, %v471
  %v474 = vmul.f32 %v412, %v471
  %v475 = vmul.f32 %v413, %v471
  %v476 = vadd.f32 %v464, %v472
  %v477 = vadd.f32 %v465, %v473
  %v478 = vadd.f32 %v466, %v474
  %v479 = vadd.f32 %v467, %v475
  %v480 = vmax.f32 %v476, 0.0
  %v481 = vmax.f32 %v477, 0.0
  %v482 = vmax.f32 %v478, 0.0
  %v483 = vmax.f32 %v479, 0.0
  %v484 = vmul.f32 %v414, %v480
  %v485 = vmul.f32 %v415, %v481
  %v486 = vmul.f32 %v416, %v482
  %v487 = vmul.f32 %v417, %v483
  %v488 = vadd.f32 %v484, %v485
  %v489 = vadd.f32 %v488, %v486
  %v490 = vadd.f32 %v489, %v487
  %v491 = vrot.slane %v490, 4
  %v492 = vadd.f32 %v490, %v491
  %v493 = vrot.slane %v492, 2
  %v494 = vadd.f32 %v492, %v493
  %v495 = vrot.slane %v494, 1
  %v496 = vadd.f32 %v494, %v495
  %v497 = vadd.f32 %v496, %v393
  %v498 = vmul.f32 %v418, %v480
  %v499 = vmul.f32 %v419, %v481
  %v500 = vmul.f32 %v420, %v482
  %v501 = vmul.f32 %v421, %v483
  %v502 = vadd.f32 %v498, %v499
  %v503 = vadd.f32 %v502, %v500
  %v504 = vadd.f32 %v503, %v501
  %v505 = vrot.slane %v504, 4
  %v506 = vadd.f32 %v504, %v505
  %v507 = vrot.slane %v506, 2
  %v508 = vadd.f32 %v506, %v507
  %v509 = vrot.slane %v508, 1
  %v510 = vadd.f32 %v508, %v509
  %v511 = vadd.f32 %v510, %v393
  %v512 = vmul.f32 %v422, %v480
  %v513 = vmul.f32 %v423, %v481
  %v514 = vmul.f32 %v424, %v482
  %v515 = vmul.f32 %v425, %v483
  %v516 = vadd.f32 %v512, %v513
  %v517 = vadd.f32 %v516, %v514
  %v518 = vadd.f32 %v517, %v515
  %v519 = vrot.slane %v518, 4
  %v520 = vadd.f32 %v518, %v519
  %v521 = vrot.slane %v520, 2
  %v522 = vadd.f32 %v520, %v521
  %v523 = vrot.slane %v522, 1
  %v524 = vadd.f32 %v522, %v523
  %v525 = vadd.f32 %v524, %v393
  %v526 = vmul.f32 %v426, %v480
  %v527 = vmul.f32 %v427, %v481
  %v528 = vmul.f32 %v428, %v482
  %v529 = vmul.f32 %v429, %v483
  %v530 = vadd.f32 %v526, %v527
  %v531 = vadd.f32 %v530, %v528
  %v532 = vadd.f32 %v531, %v529
  %v533 = vrot.slane %v532, 4
  %v534 = vadd.f32 %v532, %v533
  %v535 = vrot.slane %v534, 2
  %v536 = vadd.f32 %v534, %v535
  %v537 = vrot.slane %v536, 1
  %v538 = vadd.f32 %v536, %v537
  %v539 = vadd.f32 %v538, %v393
  %v540 = vlaneseq
  %v541 = vshrl.u32 %v540, 7
  %v542 = vsub.s32 4, %v541
  %v543 = vrot.slane %v430, %v542
  %v544 = vmul.f32 %v398, %v543
  %v545 = vmul.f32 %v399, %v543
  %v546 = vmul.f32 %v400, %v543
  %v547 = vmul.f32 %v401, %v543
  %v548 = vadd.f32 %v313, %v544
  %v549 = vadd.f32 %v316, %v545
  %v550 = vadd.f32 %v321, %v546
  %v551 = vadd.f32 %v324, %v547
  %v552 = vlaneseq
  %v553 = vshrl.u32 %v552, 7
  %v554 = vsub.s32 5, %v553
  %v555 = vrot.slane %v430, %v554
  %v556 = vmul.f32 %v402, %v555
  %v557 = vmul.f32 %v403, %v555
  %v558 = vmul.f32 %v404, %v555
  %v559 = vmul.f32 %v405, %v555
  %v560 = vadd.f32 %v548, %v556
  %v561 = vadd.f32 %v549, %v557
  %v562 = vadd.f32 %v550, %v558
  %v563 = vadd.f32 %v551, %v559
  %v564 = vlaneseq
  %v565 = vshrl.u32 %v564, 7
  %v566 = vsub.s32 6, %v565
  %v567 = vrot.slane %v430, %v566
  %v568 = vmul.f32 %v406, %v567
  %v569 = vmul.f32 %v407, %v567
  %v570 = vmul.f32 %v408, %v567
  %v571 = vmul.f32 %v409, %v567
  %v572 = vadd.f32 %v560, %v568
  %v573 = vadd.f32 %v561, %v569
  %v574 = vadd.f32 %v562, %v570
  %v575 = vadd.f32 %v563, %v571
  %v576 = vlaneseq
  %v577 = vshrl.u32 %v576, 7
  %v578 = vsub.s32 7, %v577
  %v579 = vrot.slane %v430, %v578
  %v580 = vmul.f32 %v410, %v579
  %v581 = vmul.f32 %v411, %v579
  %v582 = vmul.f32 %v412, %v579
  %v583 = vmul.f32 %v413, %v579
  %v584 = vadd.f32 %v572, %v580
  %v585 = vadd.f32 %v573, %v581
  %v586 = vadd.f32 %v574, %v582
  %v587 = vadd.f32 %v575, %v583
  %v588 = vmax.f32 %v584, 0.0
  %v589 = vmax.f32 %v585, 0.0
  %v590 = vmax.f32 %v586, 0.0
  %v591 = vmax.f32 %v587, 0.0
  %v592 = vmul.f32 %v414, %v588
  %v593 = vmul.f32 %v415, %v589
  %v594 = vmul.f32 %v416, %v590
  %v595 = vmul.f32 %v417, %v591
  %v596 = vadd.f32 %v592, %v593
  %v597 = vadd.f32 %v596, %v594
  %v598 = vadd.f32 %v597, %v595
  %v599 = vrot.slane %v598, 4
  %v600 = vadd.f32 %v598, %v599
  %v601 = vrot.slane %v600, 2
  %v602 = vadd.f32 %v600, %v601
  %v603 = vrot.slane %v602, 1
  %v604 = vadd.f32 %v602, %v603
  %v605 = vadd.f32 %v604, %v393
  %v606 = vmul.f32 %v418, %v588
  %v607 = vmul.f32 %v419, %v589
  %v608 = vmul.f32 %v420, %v590
  %v609 = vmul.f32 %v421, %v591
  %v610 = vadd.f32 %v606, %v607
  %v611 = vadd.f32 %v610, %v608
  %v612 = vadd.f32 %v611, %v609
  %v613 = vrot.slane %v612, 4
  %v614 = vadd.f32 %v612, %v613
  %v615 = vrot.slane %v614, 2
  %v616 = vadd.f32 %v614, %v615
  %v617 = vrot.slane %v616, 1
  %v618 = vadd.f32 %v616, %v617
  %v619 = vadd.f32 %v618, %v393
  %v620 = vmul.f32 %v422, %v588
  %v621 = vmul.f32 %v423, %v589
  %v622 = vmul.f32 %v424, %v590
  %v623 = vmul.f32 %v425, %v591
  %v624 = vadd.f32 %v620, %v621
  %v625 = vadd.f32 %v624, %v622
  %v626 = vadd.f32 %v625, %v623
  %v627 = vrot.slane %v626, 4
  %v628 = vadd.f32 %v626, %v627
  %v629 = vrot.slane %v628, 2
  %v630 = vadd.f32 %v628, %v629
  %v631 = vrot.slane %v630, 1
  %v632 = vadd.f32 %v630, %v631
  %v633 = vadd.f32 %v632, %v393
  %v634 = vmul.f32 %v426, %v588
  %v635 = vmul.f32 %v427, %v589
  %v636 = vmul.f32 %v428, %v590
  %v637 = vmul.f32 %v429, %v591
  %v638 = vadd.f32 %v634, %v635
  %v639 = vadd.f32 %v638, %v636
  %v640 = vadd.f32 %v639, %v637
  %v641 = vrot.slane %v640, 4
  %v642 = vadd.f32 %v640, %v641
  %v643 = vrot.slane %v642, 2
  %v644 = vadd.f32 %v642, %v643
  %v645 = vrot.slane %v644, 1
  %v646 = vadd.f32 %v644, %v645
  %v647 = vadd.f32 %v646, %v393
  %v648 = vlaneseq
  %v649 = vshrl.u32 %v648, 7
  %v650 = vsub.s32 0, %v649
  %v651 = vrot.slane %v431, %v650
  %v652 = vmul.f32 %v398, %v651
  %v653 = vmul.f32 %v399, %v651
  %v654 = vmul.f32 %v400, %v651
  %v655 = vmul.f32 %v401, %v651
  %v656 = vadd.f32 %v313, %v652
  %v657 = vadd.f32 %v316, %v653
  %v658 = vadd.f32 %v321, %v654
  %v659 = vadd.f32 %v324, %v655
  %v660 = vlaneseq
  %v661 = vshrl.u32 %v660, 7
  %v662 = vsub.s32 1, %v661
  %v663 = vrot.slane %v431, %v662
  %v664 = vmul.f32 %v402, %v663
  %v665 = vmul.f32 %v403, %v663
  %v666 = vmul.f32 %v404, %v663
  %v667 = vmul.f32 %v405, %v663
  %v668 = vadd.f32 %v656, %v664
  %v669 = vadd.f32 %v657, %v665
  %v670 = vadd.f32 %v658, %v666
  %v671 = vadd.f32 %v659, %v667
  %v672 = vlaneseq
  %v673 = vshrl.u32 %v672, 7
  %v674 = vsub.s32 2, %v673
  %v675 = vrot.slane %v431, %v674
  %v676 = vmul.f32 %v406, %v675
  %v677 = vmul.f32 %v407, %v675
  %v678 = vmul.f32 %v408, %v675
  %v679 = vmul.f32 %v409, %v675
  %v680 = vadd.f32 %v668, %v676
  %v681 = vadd.f32 %v669, %v677
  %v682 = vadd.f32 %v670, %v678
  %v683 = vadd.f32 %v671, %v679
  %v684 = vlaneseq
  %v685 = vshrl.u32 %v684, 7
  %v686 = vsub.s32 3, %v685
  %v687 = vrot.slane %v431, %v686
  %v688 = vmul.f32 %v410, %v687
  %v689 = vmul.f32 %v411, %v687
  %v690 = vmul.f32 %v412, %v687
  %v691 = vmul.f32 %v413, %v687
  %v692 = vadd.f32 %v680, %v688
  %v693 = vadd.f32 %v681, %v689
  %v694 = vadd.f32 %v682, %v690
  %v695 = vadd.f32 %v683, %v691
  %v696 = vmax.f32 %v692, 0.0
  %v697 = vmax.f32 %v693, 0.0
  %v698 = vmax.f32 %v694, 0.0
  %v699 = vmax.f32 %v695, 0.0
  %v700 = vmul.f32 %v414, %v696
  %v701 = vmul.f32 %v415, %v697
  %v702 = vmul.f32 %v416, %v698
  %v703 = vmul.f32 %v417, %v699
  %v704 = vadd.f32 %v700, %v701
  %v705 = vadd.f32 %v704, %v702
  %v706 = vadd.f32 %v705, %v703
  %v707 = vrot.slane %v706, 4
  %v708 = vadd.f32 %v706, %v707
  %v709 = vrot.slane %v708, 2
  %v710 = vadd.f32 %v708, %v709
  %v711 = vrot.slane %v710, 1
  %v712 = vadd.f32 %v710, %v711
  %v713 = vadd.f32 %v712, %v393
  %v714 = vmul.f32 %v418, %v696
  %v715 = vmul.f32 %v419, %v697
  %v716 = vmul.f32 %v420, %v698
  %v717 = vmul.f32 %v421, %v699
  %v718 = vadd.f32 %v714, %v715
  %v719 = vadd.f32 %v718, %v716
  %v720 = vadd.f32 %v719, %v717
  %v721 = vrot.slane %v720, 4
  %v722 = vadd.f32 %v720, %v721
  %v723 = vrot.slane %v722, 2
  %v724 = vadd.f32 %v722, %v723
  %v725 = vrot.slane %v724, 1
  %v726 = vadd.f32 %v724, %v725
  %v727 = vadd.f32 %v726, %v393
  %v728 = vmul.f32 %v422, %v696
  %v729 = vmul.f32 %v423, %v697
  %v730 = vmul.f32 %v424, %v698
  %v731 = vmul.f32 %v425, %v699
  %v732 = vadd.f32 %v728, %v729
  %v733 = vadd.f32 %v732, %v730
  %v734 = vadd.f32 %v733, %v731
  %v735 = vrot.slane %v734, 4
  %v736 = vadd.f32 %v734, %v735
  %v737 = vrot.slane %v736, 2
  %v738 = vadd.f32 %v736, %v737
  %v739 = vrot.slane %v738, 1
  %v740 = vadd.f32 %v738, %v739
  %v741 = vadd.f32 %v740, %v393
  %v742 = vmul.f32 %v426, %v696
  %v743 = vmul.f32 %v427, %v697
  %v744 = vmul.f32 %v428, %v698
  %v745 = vmul.f32 %v429, %v699
  %v746 = vadd.f32 %v742, %v743
  %v747 = vadd.f32 %v746, %v744
  %v748 = vadd.f32 %v747, %v745
  %v749 = vrot.slane %v748, 4
  %v750 = vadd.f32 %v748, %v749
  %v751 = vrot.slane %v750, 2
  %v752 = vadd.f32 %v750, %v751
  %v753 = vrot.slane %v752, 1
  %v754 = vadd.f32 %v752, %v753
  %v755 = vadd.f32 %v754, %v393
  %v756 = vlaneseq
  %v757 = vshrl.u32 %v756, 7
  %v758 = vsub.s32 4, %v757
  %v759 = vrot.slane %v431, %v758
  %v760 = vmul.f32 %v398, %v759
  %v761 = vmul.f32 %v399, %v759
  %v762 = vmul.f32 %v400, %v759
  %v763 = vmul.f32 %v401, %v759
  %v764 = vadd.f32 %v313, %v760
  %v765 = vadd.f32 %v316, %v761
  %v766 = vadd.f32 %v321, %v762
  %v767 = vadd.f32 %v324, %v763
  %v768 = vlaneseq
  %v769 = vshrl.u32 %v768, 7
  %v770 = vsub.s32 5, %v769
  %v771 = vrot.slane %v431, %v770
  %v772 = vmul.f32 %v402, %v771
  %v773 = vmul.f32 %v403, %v771
  %v774 = vmul.f32 %v404, %v771
  %v775 = vmul.f32 %v405, %v771
  %v776 = vadd.f32 %v764, %v772
  %v777 = vadd.f32 %v765, %v773
  %v778 = vadd.f32 %v766, %v774
  %v779 = vadd.f32 %v767, %v775
  %v780 = vlaneseq
  %v781 = vshrl.u32 %v780, 7
  %v782 = vsub.s32 6, %v781
  %v783 = vrot.slane %v431, %v782
  %v784 = vmul.f32 %v406, %v783
  %v785 = vmul.f32 %v407, %v783
  %v786 = vmul.f32 %v408, %v783
  %v787 = vmul.f32 %v409, %v783
  %v788 = vadd.f32 %v776, %v784
  %v789 = vadd.f32 %v777, %v785
  %v790 = vadd.f32 %v778, %v786
  %v791 = vadd.f32 %v779, %v787
  %v792 = vlaneseq
  %v793 = vshrl.u32 %v792, 7
  %v794 = vsub.s32 7, %v793
  %v795 = vrot.slane %v431, %v794
  %v796 = vmul.f32 %v410, %v795
  %v797 = vmul.f32 %v411, %v795
  %v798 = vmul.f32 %v412, %v795
  %v799 = vmul.f32 %v413, %v795
  %v800 = vadd.f32 %v788, %v796
  %v801 = vadd.f32 %v789, %v797
  %v802 = vadd.f32 %v790, %v798
  %v803 = vadd.f32 %v791, %v799
  %v804 = vmax.f32 %v800, 0.0
  %v805 = vmax.f32 %v801, 0.0
  %v806 = vmax.f32 %v802, 0.0
  %v807 = vmax.f32 %v803, 0.0
  %v808 = vmul.f32 %v414, %v804
  %v809 = vmul.f32 %v415, %v805
  %v810 = vmul.f32 %v416, %v806
  %v811 = vmul.f32 %v417, %v807
  %v812 = vadd.f32 %v808, %v809
  %v813 = vadd.f32 %v812, %v810
  %v814 = vadd.f32 %v813, %v811
  %v815 = vrot.slane %v814, 4
  %v816 = vadd.f32 %v814, %v815
  %v817 = vrot.slane %v816, 2
  %v818 = vadd.f32 %v816, %v817
  %v819 = vrot.slane %v818, 1
  %v820 = vadd.f32 %v818, %v819
  %v821 = vadd.f32 %v820, %v393
  %v822 = vmul.f32 %v418, %v804
  %v823 = vmul.f32 %v419, %v805
  %v824 = vmul.f32 %v420, %v806
  %v825 = vmul.f32 %v421, %v807
  %v826 = vadd.f32 %v822, %v823
  %v827 = vadd.f32 %v826, %v824
  %v828 = vadd.f32 %v827, %v825
  %v829 = vrot.slane %v828, 4
  %v830 = vadd.f32 %v828, %v829
  %v831 = vrot.slane %v830, 2
  %v832 = vadd.f32 %v830, %v831
  %v833 = vrot.slane %v832, 1
  %v834 = vadd.f32 %v832, %v833
  %v835 = vadd.f32 %v834, %v393
  %v836 = vmul.f32 %v422, %v804
  %v837 = vmul.f32 %v423, %v805
  %v838 = vmul.f32 %v424, %v806
  %v839 = vmul.f32 %v425, %v807
  %v840 = vadd.f32 %v836, %v837
  %v841 = vadd.f32 %v840, %v838
  %v842 = vadd.f32 %v841, %v839
  %v843 = vrot.slane %v842, 4
  %v844 = vadd.f32 %v842, %v843
  %v845 = vrot.slane %v844, 2
  %v846 = vadd.f32 %v844, %v845
  %v847 = vrot.slane %v846, 1
  %v848 = vadd.f32 %v846, %v847
  %v849 = vadd.f32 %v848, %v393
  %v850 = vmul.f32 %v426, %v804
  %v851 = vmul.f32 %v427, %v805
  %v852 = vmul.f32 %v428, %v806
  %v853 = vmul.f32 %v429, %v807
  %v854 = vadd.f32 %v850, %v851
  %v855 = vadd.f32 %v854, %v852
  %v856 = vadd.f32 %v855, %v853
  %v857 = vrot.slane %v856, 4
  %v858 = vadd.f32 %v856, %v857
  %v859 = vrot.slane %v858, 2
  %v860 = vadd.f32 %v858, %v859
  %v861 = vrot.slane %v860, 1
  %v862 = vadd.f32 %v860, %v861
  %v863 = vadd.f32 %v862, %v393
  %v865 = vrot.slane %v605, 4
  %v868 = vrot.slane %v619, 4
  %v871 = vrot.slane %v633, 4
  %v874 = vrot.slane %v647, 4
  %v877 = vrot.slane %v821, 4
  %v880 = vrot.slane %v835, 4
  %v883 = vrot.slane %v849, 4
  %v886 = vrot.slane %v863, 4
  %v888 = vsel %vm208, %v497, %v511
  %vm889 = vcmask 1041408
  %v890 = vsel %vm889, %v888, %v525
  %vm891 = vcmask 1042432
  %v892 = vsel %vm891, %v890, %v539
  %vm893 = vcmask 1043456
  %v894 = vsel %vm893, %v892, %v865
  %vm895 = vcmask 1044480
  %v896 = vsel %vm895, %v894, %v868
  %vm897 = vcmask 1045504
  %v898 = vsel %vm897, %v896, %v871
  %vm899 = vcmask 1046528
  %v900 = vsel %vm899, %v898, %v874
  %v901 = vsel %vm208, %v713, %v727
  %v902 = vsel %vm889, %v901, %v741
  %v903 = vsel %vm891, %v902, %v755
  %v904 = vsel %vm893, %v903, %v877
  %v905 = vsel %vm895, %v904, %v880
  %v906 = vsel %vm897, %v905, %v883
  %v907 = vsel %vm899, %v906, %v886
  %908 = vst [vmem:[%s3] sm:$0xff] %v900
  %909 = vst [vmem:[%s3 + $0x8] sm:$0xff] %v907
  // Predicated region
  $region14: #{_qmix_forward_impl.1} parent=0 // pred_check
    _
  $region15: #{_qmix_forward_impl.1} parent=0 // pred_check_branch
    %911 = sbr.rel (0) target = $region17
  $region16: #{_qmix_forward_impl.1} parent=0 // pred_region
    _
  $region17: #{_qmix_forward_impl.1} parent=0 // pred_fallthru
    _
  // Predicated region
  $region18: #{_qmix_forward_impl.1} parent=0 // pred_check
    _
  $region19: #{_qmix_forward_impl.1} parent=0 // pred_check_branch
    %913 = sbr.rel (0) target = $region21
  $region20: #{_qmix_forward_impl.1} parent=0 // pred_region
    _
  $region21: #{_qmix_forward_impl.1} parent=0 // pred_fallthru
    _

</llo_original>
